<compile_context>
chip_gen: v7x
topology: tpu7x:2x2x1
jax: 0.10.0
libtpu: 0.0.40
codegen_flags: <defaults>
</compile_context>

<pallas_src>
import functools

import jax
import jax.numpy as jnp
from jax.experimental import pallas as pl
from jax.experimental.pallas import tpu as pltpu

LEAKY_SLOPE = 0.2  # nn.LeakyReLU(0.2)


def _leaky_relu(h, slope):
    # For 0 < slope < 1: max(h, slope*h) == LeakyReLU(h).  One mul + one max.
    return jnp.maximum(h, slope * h)


def _discriminator_kernel(x_ref, w1_ref, b1_ref, w2_ref, b2_ref, w3_ref, b3_ref,
                          o_ref, *, slope):
    x = x_ref[...]                                    # (tile_b, D), native dtype

    # Layer 1: Linear(D -> D/2) + LeakyReLU.  MXU matmul, f32 accumulation.
    h = jnp.dot(x, w1_ref[...], preferred_element_type=jnp.float32)
    h = _leaky_relu(h + b1_ref[...].astype(jnp.float32), slope)

    # Layer 2: Linear(D/2 -> D/4) + LeakyReLU.
    h = jnp.dot(h.astype(w2_ref.dtype), w2_ref[...],
                preferred_element_type=jnp.float32)
    h = _leaky_relu(h + b2_ref[...].astype(jnp.float32), slope)

    # Layer 3: Linear(D/4 -> 1) + Sigmoid.  N=1, so use a VPU multiply +
    # cross-lane reduction instead of a degenerate MXU matmul.
    w3_row = w3_ref[...].astype(jnp.float32)          # (1, D/4) broadcasts
    logit = jnp.sum(h * w3_row, axis=-1, keepdims=True)
    logit = logit + b3_ref[0]                         # SMEM scalar

    o_ref[...] = jax.nn.sigmoid(logit).astype(o_ref.dtype)


def _tpu_vmem_capacity_bytes():
    try:
        return int(pltpu.get_tpu_info().vmem_capacity_bytes)
    except Exception:
        return 64 << 20          # conservative default (v7x per-TC VMEM)


def _num_tensorcores_per_chip():
    try:
        kind = jax.devices()[0].device_kind.lower()
    except Exception:
        return 1
    return 2 if "v7" in kind else 1   # only v7x has 2 TensorCores per chip


def _pick_tile_b(batch, requested, num_tc, bytes_per_row, vmem_budget):
    """Batch tile: as large as possible (fewer ~0.35us grid steps), capped so
    double-buffered x tiles use <= ~1/3 of the VMEM budget; split the batch
    only on v7x where dimension_semantics='parallel' can use both TCs."""
    cap = max(8, (vmem_budget // 3) // max(1, 2 * bytes_per_row))
    requested = min(int(requested), int(cap))
    requested = max(8, (requested // 8) * 8)
    if batch <= requested:
        if num_tc >= 2 and batch >= 16:
            half = (batch + 1) // 2
            half = ((half + 7) // 8) * 8      # multiple of 8 (sublane)
            if half < batch:
                return half                   # 2 grid steps -> both v7x TCs busy
        return batch                          # single full-batch step (1 TC chips)
    return requested


def vec2vec_discriminator(x, w1, b1, w2, b2, w3, b3, *, tile_b=1024,
                          matmul_dtype=None):
    """x: (B, D); w1: (D, D/2); w2: (D/2, D/4); w3: (D/4, 1).

    matmul_dtype: optionally cast x/W1/W2 (e.g. to jnp.bfloat16) for native-rate
    MXU on v6e/v7x; accumulation & activations remain f32."""
    B, D = x.shape
    D2 = w1.shape[1]
    D4 = w2.shape[1]
    assert w1.shape == (D, D2) and b1.shape == (D2,)
    assert w2.shape == (D2, D4) and b2.shape == (D4,)
    assert w3.shape == (D4, 1) and b3.shape == (1,)

    out_dtype = x.dtype
    if matmul_dtype is not None:
        x = x.astype(matmul_dtype)
        w1 = w1.astype(matmul_dtype)
        w2 = w2.astype(matmul_dtype)

    # Lane-dense (1, N) rows for small params; b3 goes to SMEM as a scalar.
    b1r = b1.reshape(1, D2).astype(jnp.float32)
    b2r = b2.reshape(1, D4).astype(jnp.float32)
    w3r = w3.reshape(1, D4).astype(jnp.float32)
    b3r = b3.reshape(1).astype(jnp.float32)

    num_tc = _num_tensorcores_per_chip()
    vmem_cap = _tpu_vmem_capacity_bytes()
    vmem_budget = int(vmem_cap * 0.85)        # ~108 MiB v5e/v6e, ~54 MiB v7x

    x_it = jnp.dtype(x.dtype).itemsize
    o_it = jnp.dtype(out_dtype).itemsize
    tile_b = _pick_tile_b(B, tile_b, num_tc, D * x_it, vmem_budget)
    grid = (pl.cdiv(B, tile_b),)              # cdiv: non-divisible B keeps big tiles

    # VMEM estimate: double-buffered x/out tiles + (<=2x) parameter buffers.
    w_bytes = (D * D2) * jnp.dtype(w1.dtype).itemsize \
        + (D2 * D4) * jnp.dtype(w2.dtype).itemsize
    v_bytes = (D2 + 2 * D4) * 4
    est = 2 * tile_b * (D * x_it + o_it) + 2 * (w_bytes + v_bytes)
    vmem_limit = int(min(max(2 * est, 32 << 20), vmem_budget))
    # TODO(synk): for very large D where W1 (D*D/2*4B) no longer fits v7x VMEM,
    # add a K-tiled 'arbitrary' grid axis (or emit_pipeline over K chunks with
    # W1 left in HBM) instead of assuming a fully resident W1.

    kernel = functools.partial(_discriminator_kernel, slope=LEAKY_SLOPE)

    def _weight_spec(shape, single_buffered):
        idx = lambda i, _n=len(shape): (0,) * _n   # constant index -> DMA'd once
        if single_buffered:
            return pl.BlockSpec(shape, idx, pipeline_mode=pl.Buffered(1))
        return pl.BlockSpec(shape, idx)

    def _run(single_buffered):
        return pl.pallas_call(
            kernel,
            out_shape=jax.ShapeDtypeStruct((B, 1), out_dtype),
            grid_spec=pltpu.PrefetchScalarGridSpec(
                num_scalar_prefetch=0,
                grid=grid,
                in_specs=[
                    pl.BlockSpec((tile_b, D), lambda i: (i, 0)),       # x tile
                    _weight_spec((D, D2), single_buffered),            # W1
                    _weight_spec((1, D2), single_buffered),            # b1
                    _weight_spec((D2, D4), single_buffered),           # W2
                    _weight_spec((1, D4), single_buffered),            # b2
                    _weight_spec((1, D4), single_buffered),            # W3 row
                    pl.BlockSpec(memory_space=pltpu.MemorySpace.SMEM),  # b3 scalar
                ],
                out_specs=pl.BlockSpec((tile_b, 1), lambda i: (i, 0)),
            ),
            compiler_params=pltpu.CompilerParams(
                dimension_semantics=("parallel",),
                vmem_limit_bytes=vmem_limit),
        )(x, w1, b1r, w2, b2r, w3r, b3r)

    try:
        return _run(single_buffered=True)
    except Exception:
        # Fallback if this Pallas build rejects pl.Buffered(1) on inputs.
        return _run(single_buffered=False)


def _reference(x, w1, b1, w2, b2, w3, b3):
    h = x @ w1 + b1
    h = jnp.where(h >= 0, h, LEAKY_SLOPE * h)
    h = h @ w2 + b2
    h = jnp.where(h >= 0, h, LEAKY_SLOPE * h)
    h = h @ w3 + b3
    return jax.nn.sigmoid(h)


if __name__ == "__main__":
    key = jax.random.PRNGKey(0)
    B, D = 16, 32                        # input_dim=32 -> hidden 16, 8, out 1
    D2, D4 = D // 2, D // 4

    keys = jax.random.split(key, 7)
    x = jax.random.normal(keys[0], (B, D), dtype=jnp.float32)

    def linear_init(kw, kb, fan_in, fan_out):
        bound = 1.0 / (fan_in ** 0.5)    # torch.nn.Linear default init
        w = jax.random.uniform(kw, (fan_in, fan_out), jnp.float32, -bound, bound)
        b = jax.random.uniform(kb, (fan_out,), jnp.float32, -bound, bound)
        return w, b

    w1, b1 = linear_init(keys[1], keys[2], D, D2)
    w2, b2 = linear_init(keys[3], keys[4], D2, D4)
    w3, b3 = linear_init(keys[5], keys[6], D4, 1)

    ref = _reference(x, w1, b1, w2, b2, w3, b3)

    # f32 MXU path (strict tolerance).
    out = jax.block_until_ready(vec2vec_discriminator(x, w1, b1, w2, b2, w3, b3))
    assert out.shape == (B, 1)
    assert jnp.allclose(out, ref, atol=1e-5, rtol=1e-5), "f32 path mismatch"

    # bf16 MXU path (perf-review recommendation; looser tolerance).
    out_bf16 = jax.block_until_ready(
        vec2vec_discriminator(x, w1, b1, w2, b2, w3, b3,
                              matmul_dtype=jnp.bfloat16))
    assert out_bf16.shape == (B, 1)
    assert jnp.allclose(out_bf16.astype(jnp.float32), ref,
                        atol=2e-2, rtol=2e-2), "bf16 path mismatch"

    print("KERNEL_OK")
</pallas_src>

<mosaic_0001>
module attributes {stable_mosaic.version = 11 : i64} {
  func.func @_discriminator_kernel(%arg0: i32, %arg1: memref<16x32xf32, #tpu.memory_space<vmem>>, %arg2: memref<32x16xf32, #tpu.memory_space<vmem>>, %arg3: memref<1x16xf32, #tpu.memory_space<vmem>>, %arg4: memref<16x8xf32, #tpu.memory_space<vmem>>, %arg5: memref<1x8xf32, #tpu.memory_space<vmem>>, %arg6: memref<1x8xf32, #tpu.memory_space<vmem>>, %arg7: memref<1xf32, #tpu.memory_space<smem>>, %arg8: memref<16x1xf32, #tpu.memory_space<vmem>>) attributes {dimension_semantics = [#tpu.dimension_semantics<parallel>], iteration_bounds = array<i64: 1>, scalar_prefetch = 0 : i64, scratch_operands = 0 : i64, tpu.core_type = #tpu.core_type<tc>, window_params = [{transform_indices = @transform_0, window_bounds = array<i64: 16, 32>}, {pipeline_mode = #tpu.pipeline_mode<synchronous>, transform_indices = @transform_1, window_bounds = array<i64: 32, 16>}, {pipeline_mode = #tpu.pipeline_mode<synchronous>, transform_indices = @transform_2, window_bounds = array<i64: 1, 16>}, {pipeline_mode = #tpu.pipeline_mode<synchronous>, transform_indices = @transform_3, window_bounds = array<i64: 16, 8>}, {pipeline_mode = #tpu.pipeline_mode<synchronous>, transform_indices = @transform_4, window_bounds = array<i64: 1, 8>}, {pipeline_mode = #tpu.pipeline_mode<synchronous>, transform_indices = @transform_5, window_bounds = array<i64: 1, 8>}, {transform_indices = @transform_6, window_bounds = array<i64: 1>}, {transform_indices = @transform_7, window_bounds = array<i64: 16, 1>}]} {
    %c0 = arith.constant 0 : index
    %c0_0 = arith.constant 0 : index
    %0 = vector.load %arg1[%c0, %c0_0] : memref<16x32xf32, #tpu.memory_space<vmem>>, vector<16x32xf32>
    %c0_1 = arith.constant 0 : index
    %c0_2 = arith.constant 0 : index
    %1 = vector.load %arg2[%c0_1, %c0_2] : memref<32x16xf32, #tpu.memory_space<vmem>>, vector<32x16xf32>
    %cst = arith.constant dense<0.000000e+00> : vector<16x16xf32>
    %2 = tpu.matmul %0, %1, %cst {dimension_numbers = #tpu.dot_dimension_numbers<[1], [0], [0], [1], [0, 0, 1, 1], [], []>} : vector<16x32xf32>, vector<32x16xf32>, vector<16x16xf32> -> vector<16x16xf32>
    %c0_3 = arith.constant 0 : index
    %c0_4 = arith.constant 0 : index
    %3 = vector.load %arg3[%c0_3, %c0_4] : memref<1x16xf32, #tpu.memory_space<vmem>>, vector<1x16xf32>
    %4 = vector.broadcast %3 : vector<1x16xf32> to vector<16x16xf32>
    %5 = arith.addf %2, %4 : vector<16x16xf32>
    %cst_5 = arith.constant 2.000000e-01 : f32
    %6 = vector.broadcast %cst_5 : f32 to vector<16x16xf32>
    %7 = arith.mulf %6, %5 : vector<16x16xf32>
    %8 = arith.maximumf %5, %7 : vector<16x16xf32>
    %c0_6 = arith.constant 0 : index
    %c0_7 = arith.constant 0 : index
    %9 = vector.load %arg4[%c0_6, %c0_7] : memref<16x8xf32, #tpu.memory_space<vmem>>, vector<16x8xf32>
    %cst_8 = arith.constant dense<0.000000e+00> : vector<16x8xf32>
    %10 = tpu.matmul %8, %9, %cst_8 {dimension_numbers = #tpu.dot_dimension_numbers<[1], [0], [0], [1], [0, 0, 1, 1], [], []>} : vector<16x16xf32>, vector<16x8xf32>, vector<16x8xf32> -> vector<16x8xf32>
    %c0_9 = arith.constant 0 : index
    %c0_10 = arith.constant 0 : index
    %11 = vector.load %arg5[%c0_9, %c0_10] : memref<1x8xf32, #tpu.memory_space<vmem>>, vector<1x8xf32>
    %12 = vector.broadcast %11 : vector<1x8xf32> to vector<16x8xf32>
    %13 = arith.addf %10, %12 : vector<16x8xf32>
    %cst_11 = arith.constant 2.000000e-01 : f32
    %14 = vector.broadcast %cst_11 : f32 to vector<16x8xf32>
    %15 = arith.mulf %14, %13 : vector<16x8xf32>
    %16 = arith.maximumf %13, %15 : vector<16x8xf32>
    %c0_12 = arith.constant 0 : index
    %c0_13 = arith.constant 0 : index
    %17 = vector.load %arg6[%c0_12, %c0_13] : memref<1x8xf32, #tpu.memory_space<vmem>>, vector<1x8xf32>
    %18 = vector.broadcast %17 : vector<1x8xf32> to vector<16x8xf32>
    %19 = arith.mulf %16, %18 : vector<16x8xf32>
    %cst_14 = arith.constant dense<0.000000e+00> : vector<16xf32>
    %20 = vector.multi_reduction <add>, %19, %cst_14 [1] : vector<16x8xf32> to vector<16xf32>
    %21 = vector.shape_cast %20 : vector<16xf32> to vector<16x1xf32>
    %c0_15 = arith.constant 0 : index
    %22 = memref.load %arg7[%c0_15] : memref<1xf32, #tpu.memory_space<smem>>
    %23 = vector.broadcast %22 : f32 to vector<16x1xf32>
    %24 = arith.addf %21, %23 : vector<16x1xf32>
    %25 = arith.negf %24 : vector<16x1xf32>
    %26 = math.exp %25 : vector<16x1xf32>
    %cst_16 = arith.constant 1.000000e+00 : f32
    %27 = vector.broadcast %cst_16 : f32 to vector<16x1xf32>
    %28 = arith.addf %27, %26 : vector<16x1xf32>
    %29 = arith.divf %27, %28 : vector<16x1xf32>
    %c0_17 = arith.constant 0 : index
    %c0_18 = arith.constant 0 : index
    %30 = vector.load %arg8[%c0_17, %c0_18] : memref<16x1xf32, #tpu.memory_space<vmem>>, vector<16x1xf32>
    tpu.vector_store %arg8[%c0_17, %c0_18], %29 {strides = array<i32>} : memref<16x1xf32, #tpu.memory_space<vmem>>, vector<16x1xf32>,
    return
  }
  func.func @transform_0(%arg0: i32) -> (i32, i32) {
    %c0_i32 = arith.constant 0 : i32
    %c0_i32_0 = arith.constant 0 : i32
    return %arg0, %c0_i32 : i32, i32
  }
  func.func @transform_1(%arg0: i32) -> (i32, i32) {
    %c0_i32 = arith.constant 0 : i32
    %c0_i32_0 = arith.constant 0 : i32
    %c0_i32_1 = arith.constant 0 : i32
    return %c0_i32, %c0_i32_0 : i32, i32
  }
  func.func @transform_2(%arg0: i32) -> (i32, i32) {
    %c0_i32 = arith.constant 0 : i32
    %c0_i32_0 = arith.constant 0 : i32
    %c0_i32_1 = arith.constant 0 : i32
    return %c0_i32, %c0_i32_0 : i32, i32
  }
  func.func @transform_3(%arg0: i32) -> (i32, i32) {
    %c0_i32 = arith.constant 0 : i32
    %c0_i32_0 = arith.constant 0 : i32
    %c0_i32_1 = arith.constant 0 : i32
    return %c0_i32, %c0_i32_0 : i32, i32
  }
  func.func @transform_4(%arg0: i32) -> (i32, i32) {
    %c0_i32 = arith.constant 0 : i32
    %c0_i32_0 = arith.constant 0 : i32
    %c0_i32_1 = arith.constant 0 : i32
    return %c0_i32, %c0_i32_0 : i32, i32
  }
  func.func @transform_5(%arg0: i32) -> (i32, i32) {
    %c0_i32 = arith.constant 0 : i32
    %c0_i32_0 = arith.constant 0 : i32
    %c0_i32_1 = arith.constant 0 : i32
    return %c0_i32, %c0_i32_0 : i32, i32
  }
  func.func @transform_6(%arg0: i32) -> i32 {
    %c0_i32 = arith.constant 0 : i32
    %c0_i32_0 = arith.constant 0 : i32
    return %c0_i32 : i32
  }
  func.func @transform_7(%arg0: i32) -> (i32, i32) {
    %c0_i32 = arith.constant 0 : i32
    %c0_i32_0 = arith.constant 0 : i32
    return %arg0, %c0_i32 : i32, i32
  }
}

module attributes {stable_mosaic.version = 11 : i64} {
  func.func @_discriminator_kernel(%arg0: i32, %arg1: memref<16x32xf32, #tpu.memory_space<vmem>>, %arg2: memref<32x16xf32, #tpu.memory_space<vmem>>, %arg3: memref<1x16xf32, #tpu.memory_space<vmem>>, %arg4: memref<16x8xf32, #tpu.memory_space<vmem>>, %arg5: memref<1x8xf32, #tpu.memory_space<vmem>>, %arg6: memref<1x8xf32, #tpu.memory_space<vmem>>, %arg7: memref<1xf32, #tpu.memory_space<smem>>, %arg8: memref<16x1xf32, #tpu.memory_space<vmem>>) attributes {dimension_semantics = [#tpu.dimension_semantics<parallel>], iteration_bounds = array<i64: 1>, scalar_prefetch = 0 : i64, scratch_operands = 0 : i64, tpu.core_type = #tpu.core_type<tc>, window_params = [{transform_indices = @transform_0, window_bounds = array<i64: 16, 32>}, {pipeline_mode = #tpu.pipeline_mode<synchronous>, transform_indices = @transform_1, window_bounds = array<i64: 32, 16>}, {pipeline_mode = #tpu.pipeline_mode<synchronous>, transform_indices = @transform_2, window_bounds = array<i64: 1, 16>}, {pipeline_mode = #tpu.pipeline_mode<synchronous>, transform_indices = @transform_3, window_bounds = array<i64: 16, 8>}, {pipeline_mode = #tpu.pipeline_mode<synchronous>, transform_indices = @transform_4, window_bounds = array<i64: 1, 8>}, {pipeline_mode = #tpu.pipeline_mode<synchronous>, transform_indices = @transform_5, window_bounds = array<i64: 1, 8>}, {transform_indices = @transform_6, window_bounds = array<i64: 1>}, {transform_indices = @transform_7, window_bounds = array<i64: 16, 1>}]} {
    %c0 = arith.constant 0 : index
    %c0_0 = arith.constant 0 : index
    %0 = vector.load %arg1[%c0, %c0_0] : memref<16x32xf32, #tpu.memory_space<vmem>>, vector<16x32xf32>
    %c0_1 = arith.constant 0 : index
    %c0_2 = arith.constant 0 : index
    %1 = vector.load %arg2[%c0_1, %c0_2] : memref<32x16xf32, #tpu.memory_space<vmem>>, vector<32x16xf32>
    %cst = arith.constant dense<0.000000e+00> : vector<16x16xf32>
    %2 = tpu.matmul %0, %1, %cst {dimension_numbers = #tpu.dot_dimension_numbers<[1], [0], [0], [1], [0, 0, 1, 1], [], []>} : vector<16x32xf32>, vector<32x16xf32>, vector<16x16xf32> -> vector<16x16xf32>
    %c0_3 = arith.constant 0 : index
    %c0_4 = arith.constant 0 : index
    %3 = vector.load %arg3[%c0_3, %c0_4] : memref<1x16xf32, #tpu.memory_space<vmem>>, vector<1x16xf32>
    %4 = vector.broadcast %3 : vector<1x16xf32> to vector<16x16xf32>
    %5 = arith.addf %2, %4 : vector<16x16xf32>
    %cst_5 = arith.constant 2.000000e-01 : f32
    %6 = vector.broadcast %cst_5 : f32 to vector<16x16xf32>
    %7 = arith.mulf %6, %5 : vector<16x16xf32>
    %8 = arith.maximumf %5, %7 : vector<16x16xf32>
    %c0_6 = arith.constant 0 : index
    %c0_7 = arith.constant 0 : index
    %9 = vector.load %arg4[%c0_6, %c0_7] : memref<16x8xf32, #tpu.memory_space<vmem>>, vector<16x8xf32>
    %cst_8 = arith.constant dense<0.000000e+00> : vector<16x8xf32>
    %10 = tpu.matmul %8, %9, %cst_8 {dimension_numbers = #tpu.dot_dimension_numbers<[1], [0], [0], [1], [0, 0, 1, 1], [], []>} : vector<16x16xf32>, vector<16x8xf32>, vector<16x8xf32> -> vector<16x8xf32>
    %c0_9 = arith.constant 0 : index
    %c0_10 = arith.constant 0 : index
    %11 = vector.load %arg5[%c0_9, %c0_10] : memref<1x8xf32, #tpu.memory_space<vmem>>, vector<1x8xf32>
    %12 = vector.broadcast %11 : vector<1x8xf32> to vector<16x8xf32>
    %13 = arith.addf %10, %12 : vector<16x8xf32>
    %cst_11 = arith.constant 2.000000e-01 : f32
    %14 = vector.broadcast %cst_11 : f32 to vector<16x8xf32>
    %15 = arith.mulf %14, %13 : vector<16x8xf32>
    %16 = arith.maximumf %13, %15 : vector<16x8xf32>
    %c0_12 = arith.constant 0 : index
    %c0_13 = arith.constant 0 : index
    %17 = vector.load %arg6[%c0_12, %c0_13] : memref<1x8xf32, #tpu.memory_space<vmem>>, vector<1x8xf32>
    %18 = vector.broadcast %17 : vector<1x8xf32> to vector<16x8xf32>
    %19 = arith.mulf %16, %18 : vector<16x8xf32>
    %cst_14 = arith.constant dense<0.000000e+00> : vector<16xf32>
    %20 = vector.multi_reduction <add>, %19, %cst_14 [1] : vector<16x8xf32> to vector<16xf32>
    %21 = vector.shape_cast %20 : vector<16xf32> to vector<16x1xf32>
    %c0_15 = arith.constant 0 : index
    %22 = memref.load %arg7[%c0_15] : memref<1xf32, #tpu.memory_space<smem>>
    %23 = vector.broadcast %22 : f32 to vector<16x1xf32>
    %24 = arith.addf %21, %23 : vector<16x1xf32>
    %25 = arith.negf %24 : vector<16x1xf32>
    %26 = math.exp %25 : vector<16x1xf32>
    %cst_16 = arith.constant 1.000000e+00 : f32
    %27 = vector.broadcast %cst_16 : f32 to vector<16x1xf32>
    %28 = arith.addf %27, %26 : vector<16x1xf32>
    %29 = arith.divf %27, %28 : vector<16x1xf32>
    %c0_17 = arith.constant 0 : index
    %c0_18 = arith.constant 0 : index
    %30 = vector.load %arg8[%c0_17, %c0_18] : memref<16x1xf32, #tpu.memory_space<vmem>>, vector<16x1xf32>
    tpu.vector_store %arg8[%c0_17, %c0_18], %29 {strides = array<i32>} : memref<16x1xf32, #tpu.memory_space<vmem>>, vector<16x1xf32>,
    return
  }
  func.func @transform_0(%arg0: i32) -> (i32, i32) {
    %c0_i32 = arith.constant 0 : i32
    %c0_i32_0 = arith.constant 0 : i32
    return %arg0, %c0_i32 : i32, i32
  }
  func.func @transform_1(%arg0: i32) -> (i32, i32) {
    %c0_i32 = arith.constant 0 : i32
    %c0_i32_0 = arith.constant 0 : i32
    %c0_i32_1 = arith.constant 0 : i32
    return %c0_i32, %c0_i32_0 : i32, i32
  }
  func.func @transform_2(%arg0: i32) -> (i32, i32) {
    %c0_i32 = arith.constant 0 : i32
    %c0_i32_0 = arith.constant 0 : i32
    %c0_i32_1 = arith.constant 0 : i32
    return %c0_i32, %c0_i32_0 : i32, i32
  }
  func.func @transform_3(%arg0: i32) -> (i32, i32) {
    %c0_i32 = arith.constant 0 : i32
    %c0_i32_0 = arith.constant 0 : i32
    %c0_i32_1 = arith.constant 0 : i32
    return %c0_i32, %c0_i32_0 : i32, i32
  }
  func.func @transform_4(%arg0: i32) -> (i32, i32) {
    %c0_i32 = arith.constant 0 : i32
    %c0_i32_0 = arith.constant 0 : i32
    %c0_i32_1 = arith.constant 0 : i32
    return %c0_i32, %c0_i32_0 : i32, i32
  }
  func.func @transform_5(%arg0: i32) -> (i32, i32) {
    %c0_i32 = arith.constant 0 : i32
    %c0_i32_0 = arith.constant 0 : i32
    %c0_i32_1 = arith.constant 0 : i32
    return %c0_i32, %c0_i32_0 : i32, i32
  }
  func.func @transform_6(%arg0: i32) -> i32 {
    %c0_i32 = arith.constant 0 : i32
    %c0_i32_0 = arith.constant 0 : i32
    return %c0_i32 : i32
  }
  func.func @transform_7(%arg0: i32) -> (i32, i32) {
    %c0_i32 = arith.constant 0 : i32
    %c0_i32_0 = arith.constant 0 : i32
    return %arg0, %c0_i32 : i32, i32
  }
}

</mosaic_0001>

<llo_original>
// kernel: tpu_custom_call.1
$region0: #{tpu_custom_call.1}
  #allocation0 [shape = 'u32[]', space=smem, size = 0x4, offset = 0x4, fixed_abs, tag = 'smem constant byte address 0x4 - core index']
  #allocation1 [shape = 'u32[144,128]{1,0:T(1,128)}', space=vmem, size = 0x12000, scoped, tag = 'internal scratch']
  #allocation2 [shape = 'f32[1]{0:T(128)S(6)}', space=smem, size = 0x200, scoped, tag = 'scoped memory for tpu_custom_call.1']
  %s0 = inlined_call_operand.vmem [shape: f32[16,32], index: 0, kind: input, shape index: {}]
  %s1 = inlined_call_operand.vmem [shape: f32[32,16], index: 1, kind: input, shape index: {}]
  %s2 = inlined_call_operand.vmem [shape: f32[1,16], index: 2, kind: input, shape index: {}]
  %s3 = inlined_call_operand.vmem [shape: f32[16,8], index: 3, kind: input, shape index: {}]
  %s4 = inlined_call_operand.vmem [shape: f32[1,8], index: 4, kind: input, shape index: {}]
  %s5 = inlined_call_operand.vmem [shape: f32[1,8], index: 5, kind: input, shape index: {}]
  %s6 = inlined_call_operand.<no memory space> [shape: f32[1], index: 6, kind: input, shape index: {}]
  %s7 = inlined_call_operand.vmem [shape: f32[16,1], index: 7, kind: output, shape index: {}]
  %s8 = sld [smem:[#allocation0]]
  $region38: #{tpu_custom_call.1} parent=0
    _
  %s10 = ssub.s32 1, %s8
  %s11 = scalar_select 0, %s10, %s8
  %12 = sst [smem:[#allocation2]] %s6
  // Predicated region
  $region2: #{tpu_custom_call.1} parent=0 // pred_check
    _
  $region3: #{tpu_custom_call.1} parent=0 // pred_check_branch
    %14 = sbr.rel (0) target = $region5
  $region4: #{tpu_custom_call.1} parent=0 // pred_region
    _
  $region5: #{tpu_custom_call.1} parent=0 // pred_fallthru
    _
  // Predicated region
  $region6: #{tpu_custom_call.1} parent=0 // pred_check
    _
  $region7: #{tpu_custom_call.1} parent=0 // pred_check_branch
    %16 = sbr.rel (0) target = $region9
  $region8: #{tpu_custom_call.1} parent=0 // pred_region
    _
  $region9: #{tpu_custom_call.1} parent=0 // pred_fallthru
    _
  // Predicated region
  $region10: #{tpu_custom_call.1} parent=0 // pred_check
    _
  $region11: #{tpu_custom_call.1} parent=0 // pred_check_branch
    %18 = sbr.rel (0) target = $region13
  $region12: #{tpu_custom_call.1} parent=0 // pred_region
    _
  $region13: #{tpu_custom_call.1} parent=0 // pred_fallthru
    _
  // Predicated region
  $region14: #{tpu_custom_call.1} parent=0 // pred_check
    _
  $region15: #{tpu_custom_call.1} parent=0 // pred_check_branch
    %20 = sbr.rel (0) target = $region17
  $region16: #{tpu_custom_call.1} parent=0 // pred_region
    _
  $region17: #{tpu_custom_call.1} parent=0 // pred_fallthru
    _
  // Predicated region
  $region18: #{tpu_custom_call.1} parent=0 // pred_check
    _
  $region19: #{tpu_custom_call.1} parent=0 // pred_check_branch
    %22 = sbr.rel (0) target = $region21
  $region20: #{tpu_custom_call.1} parent=0 // pred_region
    _
  $region21: #{tpu_custom_call.1} parent=0 // pred_fallthru
    _
  // Predicated region
  $region22: #{tpu_custom_call.1} parent=0 // pred_check
    _
  $region23: #{tpu_custom_call.1} parent=0 // pred_check_branch
    %24 = sbr.rel (0) target = $region25
  $region24: #{tpu_custom_call.1} parent=0 // pred_region
    _
  $region25: #{tpu_custom_call.1} parent=0 // pred_fallthru
    _
  // Predicated region
  $region26: #{tpu_custom_call.1} parent=0 // pred_check
    _
  $region27: #{tpu_custom_call.1} parent=0 // pred_check_branch
    %26 = sbr.rel (0) target = $region29
  $region28: #{tpu_custom_call.1} parent=0 // pred_region
    _
  $region29: #{tpu_custom_call.1} parent=0 // pred_fallthru
    _
  %v27 = vld [vmem:[%s0] sm:$0xff]
  %v28 = vld [vmem:[%s0 + $0x8] sm:$0xff]
  %v29 = vld [vmem:[%s1] sm:$0xff]
  %v30 = vld [vmem:[%s1 + $0x8] sm:$0xff]
  %v31 = vld [vmem:[%s1 + $0x10] sm:$0xff]
  %v32 = vld [vmem:[%s1 + $0x18] sm:$0xff]
  %v33 = vld [vmem:[%s2] sm:$0x1]
  %v35 = vlaneseq
  %v36 = vshrl.u32 %v35, 7
  %v37 = vsub.s32 0, %v36
  %v38 = vrot.slane %v33, %v37
  %vm40 = vcmask 261120
  %v42 = vsel %vm40, %v27, 0
  %v45 = vsel %vm40, %v28, 0
  %47 = vmatprep.subr.mxu0 0.0
  %48 = vmatpush1.msra.mxu0 %v29
  %49 = vmatprep.subr.mxu0 0.0
  %50 = vmatpush1.msra.mxu0 %v30
  %51 = vmatprep.subr.mxu0 0.0
  %52 = vmatpush1.msra.mxu0 %v31
  %53 = vmatprep.subr.mxu0 0.0
  %54 = vmatpush1.msra.mxu0 %v32
  %55 = vmatprep.subr.mxu0 0.0
  %56 = vmatpush1.msra.mxu0 0.0
  %57 = vmatprep.subr.mxu0 0.0
  %58 = vmatpush1.msra.mxu0 0.0
  %59 = vmatprep.subr.mxu0 0.0
  %60 = vmatpush1.msra.mxu0 0.0
  %61 = vmatprep.subr.mxu0 0.0
  %62 = vmatpush1.msra.mxu0 0.0
  %63 = vmatprep.subr.mxu0 0.0
  %64 = vmatpush1.msra.mxu0 0.0
  %65 = vmatprep.subr.mxu0 0.0
  %66 = vmatpush1.msra.mxu0 0.0
  %67 = vmatprep.subr.mxu0 0.0
  %68 = vmatpush1.msra.mxu0 0.0
  %69 = vmatprep.subr.mxu0 0.0
  %70 = vmatpush1.msra.mxu0 0.0
  %71 = vmatprep.subr.mxu0 0.0
  %72 = vmatpush1.msra.mxu0 0.0
  %73 = vmatprep.subr.mxu0 0.0
  %74 = vmatpush1.msra.mxu0 0.0
  %75 = vmatprep.subr.mxu0 0.0
  %76 = vmatpush1.msra.mxu0 0.0
  %77 = vmatprep.subr.mxu0 0.0
  %78 = vmatpush1.msra.mxu0 0.0
  %79 = vmatprep.subr.mxu0 0.0
  %80 = vmatpush1.msra.mxu0 0.0
  %81 = vmatprep.subr.mxu0 0.0
  %82 = vmatpush1.msra.mxu0 0.0
  %83 = vmatprep.subr.mxu0 0.0
  %84 = vmatpush1.msra.mxu0 0.0
  %85 = vmatprep.subr.mxu0 0.0
  %86 = vmatpush1.msra.mxu0 0.0
  %87 = vmatprep.subr.mxu0 0.0
  %88 = vmatpush1.msra.mxu0 0.0
  %89 = vmatprep.subr.mxu0 0.0
  %90 = vmatpush1.msra.mxu0 0.0
  %91 = vmatprep.subr.mxu0 0.0
  %92 = vmatpush1.msra.mxu0 0.0
  %93 = vmatprep.subr.mxu0 0.0
  %94 = vmatpush1.msra.mxu0 0.0
  %95 = vmatprep.subr.mxu0 0.0
  %96 = vmatpush1.msra.mxu0 0.0
  %97 = vmatprep.subr.mxu0 0.0
  %98 = vmatpush1.msra.mxu0 0.0
  %99 = vmatprep.subr.mxu0 0.0
  %100 = vmatpush1.msra.mxu0 0.0
  %101 = vmatprep.subr.mxu0 0.0
  %102 = vmatpush1.msra.mxu0 0.0
  %103 = vmatprep.subr.mxu0 0.0
  %104 = vmatpush1.msra.mxu0 0.0
  %105 = vmatprep.subr.mxu0 0.0
  %106 = vmatpush1.msra.mxu0 0.0
  %107 = vmatprep.subr.mxu0 0.0
  %108 = vmatpush1.msra.mxu0 0.0
  %109 = vmatprep.subr.mxu0 0.0
  %110 = vmatpush1.msra.mxu0 0.0
  %111 = vmatprep.mubr.f32.mxu0 0.0
  %112 = vmatmul.mubr.f32.gmra.mrb[0].mxu0 %v42
  %v113 = vpop.f32.mrb[0].mxu0
  %v114 = vadd.f32 %v38, %v113
  %v115 = vpop.f32.mrb[0].mxu0
  %116 = vmatprep.mubr.f32.mxu0 0.0
  %117 = vmatmul.mubr.f32.gmra.mrb[0].mxu0 %v45
  %v118 = vpop.f32.mrb[0].mxu0
  %v119 = vadd.f32 %v38, %v118
  %v120 = vpop.f32.mrb[0].mxu0
  %121 = vdwg.mxu0
  %v122 = vmul.f32 %v114, 0.2
  %v123 = vmul.f32 %v119, 0.2
  %v124 = vmax.f32 %v114, %v122
  %v125 = vmax.f32 %v119, %v123
  %v126 = vld [vmem:[%s3] sm:$0xff]
  %v127 = vld [vmem:[%s3 + $0x8] sm:$0xff]
  %v128 = vld [vmem:[%s4] sm:$0x1]
  %v130 = vlaneseq
  %v131 = vshrl.u32 %v130, 7
  %v132 = vsub.s32 0, %v131
  %v133 = vrot.slane %v128, %v132
  %vm135 = vcmask 130048
  %v137 = vsel %vm135, %v124, 0
  %v140 = vsel %vm135, %v125, 0
  %142 = vmatprep.subr.mxu0 0.0
  %143 = vmatpush1.msra.mxu0 %v126
  %144 = vmatprep.subr.mxu0 0.0
  %145 = vmatpush1.msra.mxu0 %v127
  %146 = vmatprep.subr.mxu0 0.0
  %147 = vmatpush1.msra.mxu0 0.0
  %148 = vmatprep.subr.mxu0 0.0
  %149 = vmatpush1.msra.mxu0 0.0
  %150 = vmatprep.subr.mxu0 0.0
  %151 = vmatpush1.msra.mxu0 0.0
  %152 = vmatprep.subr.mxu0 0.0
  %153 = vmatpush1.msra.mxu0 0.0
  %154 = vmatprep.subr.mxu0 0.0
  %155 = vmatpush1.msra.mxu0 0.0
  %156 = vmatprep.subr.mxu0 0.0
  %157 = vmatpush1.msra.mxu0 0.0
  %158 = vmatprep.subr.mxu0 0.0
  %159 = vmatpush1.msra.mxu0 0.0
  %160 = vmatprep.subr.mxu0 0.0
  %161 = vmatpush1.msra.mxu0 0.0
  %162 = vmatprep.subr.mxu0 0.0
  %163 = vmatpush1.msra.mxu0 0.0
  %164 = vmatprep.subr.mxu0 0.0
  %165 = vmatpush1.msra.mxu0 0.0
  %166 = vmatprep.subr.mxu0 0.0
  %167 = vmatpush1.msra.mxu0 0.0
  %168 = vmatprep.subr.mxu0 0.0
  %169 = vmatpush1.msra.mxu0 0.0
  %170 = vmatprep.subr.mxu0 0.0
  %171 = vmatpush1.msra.mxu0 0.0
  %172 = vmatprep.subr.mxu0 0.0
  %173 = vmatpush1.msra.mxu0 0.0
  %174 = vmatprep.subr.mxu0 0.0
  %175 = vmatpush1.msra.mxu0 0.0
  %176 = vmatprep.subr.mxu0 0.0
  %177 = vmatpush1.msra.mxu0 0.0
  %178 = vmatprep.subr.mxu0 0.0
  %179 = vmatpush1.msra.mxu0 0.0
  %180 = vmatprep.subr.mxu0 0.0
  %181 = vmatpush1.msra.mxu0 0.0
  %182 = vmatprep.subr.mxu0 0.0
  %183 = vmatpush1.msra.mxu0 0.0
  %184 = vmatprep.subr.mxu0 0.0
  %185 = vmatpush1.msra.mxu0 0.0
  %186 = vmatprep.subr.mxu0 0.0
  %187 = vmatpush1.msra.mxu0 0.0
  %188 = vmatprep.subr.mxu0 0.0
  %189 = vmatpush1.msra.mxu0 0.0
  %190 = vmatprep.subr.mxu0 0.0
  %191 = vmatpush1.msra.mxu0 0.0
  %192 = vmatprep.subr.mxu0 0.0
  %193 = vmatpush1.msra.mxu0 0.0
  %194 = vmatprep.subr.mxu0 0.0
  %195 = vmatpush1.msra.mxu0 0.0
  %196 = vmatprep.subr.mxu0 0.0
  %197 = vmatpush1.msra.mxu0 0.0
  %198 = vmatprep.subr.mxu0 0.0
  %199 = vmatpush1.msra.mxu0 0.0
  %200 = vmatprep.subr.mxu0 0.0
  %201 = vmatpush1.msra.mxu0 0.0
  %202 = vmatprep.subr.mxu0 0.0
  %203 = vmatpush1.msra.mxu0 0.0
  %204 = vmatprep.subr.mxu0 0.0
  %205 = vmatpush1.msra.mxu0 0.0
  %206 = vmatprep.mubr.f32.mxu0 0.0
  %207 = vmatmul.mubr.f32.gmra.mrb[0].mxu0 %v137
  %v208 = vpop.f32.mrb[0].mxu0
  %v209 = vadd.f32 %v133, %v208
  %v210 = vpop.f32.mrb[0].mxu0
  %211 = vmatprep.mubr.f32.mxu0 0.0
  %212 = vmatmul.mubr.f32.gmra.mrb[0].mxu0 %v140
  %v213 = vpop.f32.mrb[0].mxu0
  %v214 = vadd.f32 %v133, %v213
  %v215 = vpop.f32.mrb[0].mxu0
  %216 = vdwg.mxu0
  %v217 = vmul.f32 %v209, 0.2
  %v218 = vmul.f32 %v214, 0.2
  %v219 = vmax.f32 %v209, %v217
  %v220 = vmax.f32 %v214, %v218
  %v221 = vld [vmem:[%s5] sm:$0x1]
  %v223 = vlaneseq
  %v224 = vshrl.u32 %v223, 7
  %v225 = vsub.s32 0, %v224
  %v226 = vrot.slane %v221, %v225
  %v228 = vmul.f32 %v219, %v226
  %v229 = vmul.f32 %v220, %v226
  %vm230 = vcmask 64512
  %v231 = vsel %vm230, %v228, 0.0
  %232 = vadd.xlane.f32.xlu0 %v231
  %v233 = vpop.xlane.xlu0 %232
  %v234 = vsel %vm230, %v229, 0.0
  %235 = vadd.xlane.f32.xlu0 %v234
  %v236 = vpop.xlane.xlu0 %235
  %s237 = sld [smem:[#allocation2]]
  %v238 = vstv %s237
  %v239 = vadd.f32 %v233, %v238
  %v240 = vadd.f32 %v236, %v238
  %v241 = vxor.u32 %v239, 2147483648
  %v242 = vxor.u32 %v240, 2147483648
  %v243 = vmul.f32 %v241, 1.442695
  %v244 = vpow.pop %v243
  %v245 = vmul.f32 %v242, 1.442695
  %v246 = vpow.pop %v245
  %v247 = vadd.f32 %v244, 1.0
  %v248 = vadd.f32 %v246, 1.0
  %v249 = vrcp.pop %v247
  %v250 = vmul.f32 1.0, %v249
  %v251 = vrcp.pop %v248
  %v252 = vmul.f32 1.0, %v251
  %vm253 = vcmask 7168
  %254 = vst.msk [vmem:[%s7] sm:$0xff] %vm253, %v250
  %255 = vst.msk [vmem:[%s7 + $0x8] sm:$0xff] %vm253, %v252
  // Predicated region
  $region30: #{tpu_custom_call.1} parent=0 // pred_check
    _
  $region31: #{tpu_custom_call.1} parent=0 // pred_check_branch
    %257 = sbr.rel (0) target = $region33
  $region32: #{tpu_custom_call.1} parent=0 // pred_region
    _
  $region33: #{tpu_custom_call.1} parent=0 // pred_fallthru
    _
  // Predicated region
  $region34: #{tpu_custom_call.1} parent=0 // pred_check
    _
  $region35: #{tpu_custom_call.1} parent=0 // pred_check_branch
    %259 = sbr.rel (0) target = $region37
  $region36: #{tpu_custom_call.1} parent=0 // pred_region
    _
  $region37: #{tpu_custom_call.1} parent=0 // pred_fallthru
    _

// kernel: tpu_custom_call.1
$region0: #{tpu_custom_call.1}
  #allocation0 [shape = 'u32[]', space=smem, size = 0x4, offset = 0x4, fixed_abs, tag = 'smem constant byte address 0x4 - core index']
  #allocation1 [shape = 'u32[144,128]{1,0:T(1,128)}', space=vmem, size = 0x12000, scoped, tag = 'internal scratch']
  #allocation2 [shape = 'f32[1]{0:T(128)S(6)}', space=smem, size = 0x200, scoped, tag = 'scoped memory for tpu_custom_call.1']
  %s0 = inlined_call_operand.vmem [shape: f32[16,32], index: 0, kind: input, shape index: {}]
  %s1 = inlined_call_operand.vmem [shape: f32[32,16], index: 1, kind: input, shape index: {}]
  %s2 = inlined_call_operand.vmem [shape: f32[1,16], index: 2, kind: input, shape index: {}]
  %s3 = inlined_call_operand.vmem [shape: f32[16,8], index: 3, kind: input, shape index: {}]
  %s4 = inlined_call_operand.vmem [shape: f32[1,8], index: 4, kind: input, shape index: {}]
  %s5 = inlined_call_operand.vmem [shape: f32[1,8], index: 5, kind: input, shape index: {}]
  %s6 = inlined_call_operand.<no memory space> [shape: f32[1], index: 6, kind: input, shape index: {}]
  %s7 = inlined_call_operand.vmem [shape: f32[16,1], index: 7, kind: output, shape index: {}]
  %s8 = sld [smem:[#allocation0]]
  $region38: #{tpu_custom_call.1} parent=0
    _
  %s10 = ssub.s32 1, %s8
  %s11 = scalar_select 0, %s10, %s8
  %12 = sst [smem:[#allocation2]] %s6
  // Predicated region
  $region2: #{tpu_custom_call.1} parent=0 // pred_check
    _
  $region3: #{tpu_custom_call.1} parent=0 // pred_check_branch
    %14 = sbr.rel (0) target = $region5
  $region4: #{tpu_custom_call.1} parent=0 // pred_region
    _
  $region5: #{tpu_custom_call.1} parent=0 // pred_fallthru
    _
  // Predicated region
  $region6: #{tpu_custom_call.1} parent=0 // pred_check
    _
  $region7: #{tpu_custom_call.1} parent=0 // pred_check_branch
    %16 = sbr.rel (0) target = $region9
  $region8: #{tpu_custom_call.1} parent=0 // pred_region
    _
  $region9: #{tpu_custom_call.1} parent=0 // pred_fallthru
    _
  // Predicated region
  $region10: #{tpu_custom_call.1} parent=0 // pred_check
    _
  $region11: #{tpu_custom_call.1} parent=0 // pred_check_branch
    %18 = sbr.rel (0) target = $region13
  $region12: #{tpu_custom_call.1} parent=0 // pred_region
    _
  $region13: #{tpu_custom_call.1} parent=0 // pred_fallthru
    _
  // Predicated region
  $region14: #{tpu_custom_call.1} parent=0 // pred_check
    _
  $region15: #{tpu_custom_call.1} parent=0 // pred_check_branch
    %20 = sbr.rel (0) target = $region17
  $region16: #{tpu_custom_call.1} parent=0 // pred_region
    _
  $region17: #{tpu_custom_call.1} parent=0 // pred_fallthru
    _
  // Predicated region
  $region18: #{tpu_custom_call.1} parent=0 // pred_check
    _
  $region19: #{tpu_custom_call.1} parent=0 // pred_check_branch
    %22 = sbr.rel (0) target = $region21
  $region20: #{tpu_custom_call.1} parent=0 // pred_region
    _
  $region21: #{tpu_custom_call.1} parent=0 // pred_fallthru
    _
  // Predicated region
  $region22: #{tpu_custom_call.1} parent=0 // pred_check
    _
  $region23: #{tpu_custom_call.1} parent=0 // pred_check_branch
    %24 = sbr.rel (0) target = $region25
  $region24: #{tpu_custom_call.1} parent=0 // pred_region
    _
  $region25: #{tpu_custom_call.1} parent=0 // pred_fallthru
    _
  // Predicated region
  $region26: #{tpu_custom_call.1} parent=0 // pred_check
    _
  $region27: #{tpu_custom_call.1} parent=0 // pred_check_branch
    %26 = sbr.rel (0) target = $region29
  $region28: #{tpu_custom_call.1} parent=0 // pred_region
    _
  $region29: #{tpu_custom_call.1} parent=0 // pred_fallthru
    _
  %v27 = vld [vmem:[%s0] sm:$0xff]
  %v28 = vld [vmem:[%s0 + $0x8] sm:$0xff]
  %v29 = vld [vmem:[%s1] sm:$0xff]
  %v30 = vld [vmem:[%s1 + $0x8] sm:$0xff]
  %v31 = vld [vmem:[%s1 + $0x10] sm:$0xff]
  %v32 = vld [vmem:[%s1 + $0x18] sm:$0xff]
  %v33 = vld [vmem:[%s2] sm:$0x1]
  %v35 = vlaneseq
  %v36 = vshrl.u32 %v35, 7
  %v37 = vsub.s32 0, %v36
  %v38 = vrot.slane %v33, %v37
  %vm40 = vcmask 261120
  %v42 = vsel %vm40, %v27, 0
  %v45 = vsel %vm40, %v28, 0
  %47 = vmatprep.subr.mxu0 0.0
  %48 = vmatpush1.msra.mxu0 %v29
  %49 = vmatprep.subr.mxu0 0.0
  %50 = vmatpush1.msra.mxu0 %v30
  %51 = vmatprep.subr.mxu0 0.0
  %52 = vmatpush1.msra.mxu0 %v31
  %53 = vmatprep.subr.mxu0 0.0
  %54 = vmatpush1.msra.mxu0 %v32
  %55 = vmatprep.subr.mxu0 0.0
  %56 = vmatpush1.msra.mxu0 0.0
  %57 = vmatprep.subr.mxu0 0.0
  %58 = vmatpush1.msra.mxu0 0.0
  %59 = vmatprep.subr.mxu0 0.0
  %60 = vmatpush1.msra.mxu0 0.0
  %61 = vmatprep.subr.mxu0 0.0
  %62 = vmatpush1.msra.mxu0 0.0
  %63 = vmatprep.subr.mxu0 0.0
  %64 = vmatpush1.msra.mxu0 0.0
  %65 = vmatprep.subr.mxu0 0.0
  %66 = vmatpush1.msra.mxu0 0.0
  %67 = vmatprep.subr.mxu0 0.0
  %68 = vmatpush1.msra.mxu0 0.0
  %69 = vmatprep.subr.mxu0 0.0
  %70 = vmatpush1.msra.mxu0 0.0
  %71 = vmatprep.subr.mxu0 0.0
  %72 = vmatpush1.msra.mxu0 0.0
  %73 = vmatprep.subr.mxu0 0.0
  %74 = vmatpush1.msra.mxu0 0.0
  %75 = vmatprep.subr.mxu0 0.0
  %76 = vmatpush1.msra.mxu0 0.0
  %77 = vmatprep.subr.mxu0 0.0
  %78 = vmatpush1.msra.mxu0 0.0
  %79 = vmatprep.subr.mxu0 0.0
  %80 = vmatpush1.msra.mxu0 0.0
  %81 = vmatprep.subr.mxu0 0.0
  %82 = vmatpush1.msra.mxu0 0.0
  %83 = vmatprep.subr.mxu0 0.0
  %84 = vmatpush1.msra.mxu0 0.0
  %85 = vmatprep.subr.mxu0 0.0
  %86 = vmatpush1.msra.mxu0 0.0
  %87 = vmatprep.subr.mxu0 0.0
  %88 = vmatpush1.msra.mxu0 0.0
  %89 = vmatprep.subr.mxu0 0.0
  %90 = vmatpush1.msra.mxu0 0.0
  %91 = vmatprep.subr.mxu0 0.0
  %92 = vmatpush1.msra.mxu0 0.0
  %93 = vmatprep.subr.mxu0 0.0
  %94 = vmatpush1.msra.mxu0 0.0
  %95 = vmatprep.subr.mxu0 0.0
  %96 = vmatpush1.msra.mxu0 0.0
  %97 = vmatprep.subr.mxu0 0.0
  %98 = vmatpush1.msra.mxu0 0.0
  %99 = vmatprep.subr.mxu0 0.0
  %100 = vmatpush1.msra.mxu0 0.0
  %101 = vmatprep.subr.mxu0 0.0
  %102 = vmatpush1.msra.mxu0 0.0
  %103 = vmatprep.subr.mxu0 0.0
  %104 = vmatpush1.msra.mxu0 0.0
  %105 = vmatprep.subr.mxu0 0.0
  %106 = vmatpush1.msra.mxu0 0.0
  %107 = vmatprep.subr.mxu0 0.0
  %108 = vmatpush1.msra.mxu0 0.0
  %109 = vmatprep.subr.mxu0 0.0
  %110 = vmatpush1.msra.mxu0 0.0
  %111 = vmatprep.mubr.f32.mxu0 0.0
  %112 = vmatmul.mubr.f32.gmra.mrb[0].mxu0 %v42
  %v113 = vpop.f32.mrb[0].mxu0
  %v114 = vadd.f32 %v38, %v113
  %v115 = vpop.f32.mrb[0].mxu0
  %116 = vmatprep.mubr.f32.mxu0 0.0
  %117 = vmatmul.mubr.f32.gmra.mrb[0].mxu0 %v45
  %v118 = vpop.f32.mrb[0].mxu0
  %v119 = vadd.f32 %v38, %v118
  %v120 = vpop.f32.mrb[0].mxu0
  %121 = vdwg.mxu0
  %v122 = vmul.f32 %v114, 0.2
  %v123 = vmul.f32 %v119, 0.2
  %v124 = vmax.f32 %v114, %v122
  %v125 = vmax.f32 %v119, %v123
  %v126 = vld [vmem:[%s3] sm:$0xff]
  %v127 = vld [vmem:[%s3 + $0x8] sm:$0xff]
  %v128 = vld [vmem:[%s4] sm:$0x1]
  %v130 = vlaneseq
  %v131 = vshrl.u32 %v130, 7
  %v132 = vsub.s32 0, %v131
  %v133 = vrot.slane %v128, %v132
  %vm135 = vcmask 130048
  %v137 = vsel %vm135, %v124, 0
  %v140 = vsel %vm135, %v125, 0
  %142 = vmatprep.subr.mxu0 0.0
  %143 = vmatpush1.msra.mxu0 %v126
  %144 = vmatprep.subr.mxu0 0.0
  %145 = vmatpush1.msra.mxu0 %v127
  %146 = vmatprep.subr.mxu0 0.0
  %147 = vmatpush1.msra.mxu0 0.0
  %148 = vmatprep.subr.mxu0 0.0
  %149 = vmatpush1.msra.mxu0 0.0
  %150 = vmatprep.subr.mxu0 0.0
  %151 = vmatpush1.msra.mxu0 0.0
  %152 = vmatprep.subr.mxu0 0.0
  %153 = vmatpush1.msra.mxu0 0.0
  %154 = vmatprep.subr.mxu0 0.0
  %155 = vmatpush1.msra.mxu0 0.0
  %156 = vmatprep.subr.mxu0 0.0
  %157 = vmatpush1.msra.mxu0 0.0
  %158 = vmatprep.subr.mxu0 0.0
  %159 = vmatpush1.msra.mxu0 0.0
  %160 = vmatprep.subr.mxu0 0.0
  %161 = vmatpush1.msra.mxu0 0.0
  %162 = vmatprep.subr.mxu0 0.0
  %163 = vmatpush1.msra.mxu0 0.0
  %164 = vmatprep.subr.mxu0 0.0
  %165 = vmatpush1.msra.mxu0 0.0
  %166 = vmatprep.subr.mxu0 0.0
  %167 = vmatpush1.msra.mxu0 0.0
  %168 = vmatprep.subr.mxu0 0.0
  %169 = vmatpush1.msra.mxu0 0.0
  %170 = vmatprep.subr.mxu0 0.0
  %171 = vmatpush1.msra.mxu0 0.0
  %172 = vmatprep.subr.mxu0 0.0
  %173 = vmatpush1.msra.mxu0 0.0
  %174 = vmatprep.subr.mxu0 0.0
  %175 = vmatpush1.msra.mxu0 0.0
  %176 = vmatprep.subr.mxu0 0.0
  %177 = vmatpush1.msra.mxu0 0.0
  %178 = vmatprep.subr.mxu0 0.0
  %179 = vmatpush1.msra.mxu0 0.0
  %180 = vmatprep.subr.mxu0 0.0
  %181 = vmatpush1.msra.mxu0 0.0
  %182 = vmatprep.subr.mxu0 0.0
  %183 = vmatpush1.msra.mxu0 0.0
  %184 = vmatprep.subr.mxu0 0.0
  %185 = vmatpush1.msra.mxu0 0.0
  %186 = vmatprep.subr.mxu0 0.0
  %187 = vmatpush1.msra.mxu0 0.0
  %188 = vmatprep.subr.mxu0 0.0
  %189 = vmatpush1.msra.mxu0 0.0
  %190 = vmatprep.subr.mxu0 0.0
  %191 = vmatpush1.msra.mxu0 0.0
  %192 = vmatprep.subr.mxu0 0.0
  %193 = vmatpush1.msra.mxu0 0.0
  %194 = vmatprep.subr.mxu0 0.0
  %195 = vmatpush1.msra.mxu0 0.0
  %196 = vmatprep.subr.mxu0 0.0
  %197 = vmatpush1.msra.mxu0 0.0
  %198 = vmatprep.subr.mxu0 0.0
  %199 = vmatpush1.msra.mxu0 0.0
  %200 = vmatprep.subr.mxu0 0.0
  %201 = vmatpush1.msra.mxu0 0.0
  %202 = vmatprep.subr.mxu0 0.0
  %203 = vmatpush1.msra.mxu0 0.0
  %204 = vmatprep.subr.mxu0 0.0
  %205 = vmatpush1.msra.mxu0 0.0
  %206 = vmatprep.mubr.f32.mxu0 0.0
  %207 = vmatmul.mubr.f32.gmra.mrb[0].mxu0 %v137
  %v208 = vpop.f32.mrb[0].mxu0
  %v209 = vadd.f32 %v133, %v208
  %v210 = vpop.f32.mrb[0].mxu0
  %211 = vmatprep.mubr.f32.mxu0 0.0
  %212 = vmatmul.mubr.f32.gmra.mrb[0].mxu0 %v140
  %v213 = vpop.f32.mrb[0].mxu0
  %v214 = vadd.f32 %v133, %v213
  %v215 = vpop.f32.mrb[0].mxu0
  %216 = vdwg.mxu0
  %v217 = vmul.f32 %v209, 0.2
  %v218 = vmul.f32 %v214, 0.2
  %v219 = vmax.f32 %v209, %v217
  %v220 = vmax.f32 %v214, %v218
  %v221 = vld [vmem:[%s5] sm:$0x1]
  %v223 = vlaneseq
  %v224 = vshrl.u32 %v223, 7
  %v225 = vsub.s32 0, %v224
  %v226 = vrot.slane %v221, %v225
  %v228 = vmul.f32 %v219, %v226
  %v229 = vmul.f32 %v220, %v226
  %vm230 = vcmask 64512
  %v231 = vsel %vm230, %v228, 0.0
  %232 = vadd.xlane.f32.xlu0 %v231
  %v233 = vpop.xlane.xlu0 %232
  %v234 = vsel %vm230, %v229, 0.0
  %235 = vadd.xlane.f32.xlu0 %v234
  %v236 = vpop.xlane.xlu0 %235
  %s237 = sld [smem:[#allocation2]]
  %v238 = vstv %s237
  %v239 = vadd.f32 %v233, %v238
  %v240 = vadd.f32 %v236, %v238
  %v241 = vxor.u32 %v239, 2147483648
  %v242 = vxor.u32 %v240, 2147483648
  %v243 = vmul.f32 %v241, 1.442695
  %v244 = vpow.pop %v243
  %v245 = vmul.f32 %v242, 1.442695
  %v246 = vpow.pop %v245
  %v247 = vadd.f32 %v244, 1.0
  %v248 = vadd.f32 %v246, 1.0
  %v249 = vrcp.pop %v247
  %v250 = vmul.f32 1.0, %v249
  %v251 = vrcp.pop %v248
  %v252 = vmul.f32 1.0, %v251
  %vm253 = vcmask 7168
  %254 = vst.msk [vmem:[%s7] sm:$0xff] %vm253, %v250
  %255 = vst.msk [vmem:[%s7 + $0x8] sm:$0xff] %vm253, %v252
  // Predicated region
  $region30: #{tpu_custom_call.1} parent=0 // pred_check
    _
  $region31: #{tpu_custom_call.1} parent=0 // pred_check_branch
    %257 = sbr.rel (0) target = $region33
  $region32: #{tpu_custom_call.1} parent=0 // pred_region
    _
  $region33: #{tpu_custom_call.1} parent=0 // pred_fallthru
    _
  // Predicated region
  $region34: #{tpu_custom_call.1} parent=0 // pred_check
    _
  $region35: #{tpu_custom_call.1} parent=0 // pred_check_branch
    %259 = sbr.rel (0) target = $region37
  $region36: #{tpu_custom_call.1} parent=0 // pred_region
    _
  $region37: #{tpu_custom_call.1} parent=0 // pred_fallthru
    _

</llo_original>
